<compile_context>
chip_gen: v7x
topology: tpu7x:2x2x1
jax: 0.10.0
libtpu: 0.0.40
codegen_flags: <defaults>
</compile_context>

<pallas_src>
import functools

import jax
import jax.numpy as jnp
from jax.experimental import pallas as pl
from jax.experimental.pallas import tpu as pltpu

H1 = 512   # Linear(D, 512)
H2 = 32    # Linear(512, 32)
H3 = 1     # Linear(32, 1)

_LANES = 128


def regressor_kernel(x_ref, w1_ref, b1_ref, w23_ref, b23_ref, o_ref, *, compute_dtype):
    # x_ref:   [TM, D]            (input dtype; cast below, no wrapper-side cast pass)
    # w1_ref:  [D, 512]           compute dtype (VMEM-resident)
    # b1_ref:  [1, 512]           f32
    # w23_ref: [1, 512]           f32  (fused Linear2 @ Linear3, stored as a row)
    # b23_ref: [1, 1]             f32
    # o_ref:   [TM//128, 1, 128]  f32  (rows laid out along the lane axis -> dense vst)
    tm = x_ref.shape[0]
    nsub = tm // _LANES

    x = x_ref[...].astype(compute_dtype)            # in-kernel cast: no extra HBM pass
    h = jnp.dot(x, w1_ref[...], preferred_element_type=jnp.float32)
    h = jnp.maximum(h + b1_ref[...], 0.0)           # Linear1 + bias + ReLU (f32 epilogue)
    # Dropout(0.6): identity in eval mode.

    # Fused Linear(512,32)@Linear(32,1): a single weight row w23[512].  Computing the
    # projection as a tiny batched matmul (q=1) produces the per-row logits already
    # lane-dense ([nsub, 1, 128]) straight from the MXU, so no relayout/transpose and a
    # full-width output store.
    h3 = h.reshape(nsub, _LANES, H1)                # tile-aligned split of the row dim
    w23 = jnp.broadcast_to(w23_ref[...].reshape(1, 1, H1), (nsub, 1, H1))
    logit = jnp.einsum("bqd,bkd->bqk", w23, h3,
                       preferred_element_type=jnp.float32)   # [nsub, 1, 128]
    o_ref[...] = jax.nn.sigmoid(logit + b23_ref[...])        # Sigmoid


def _select_tile_m(M, D, x_dsize, w_dsize, tile_m):
    """Row-tile size: biggest multiple of 128 that fits a ~40 MiB VMEM budget
    (safe on v7x's 64 MiB), capped at 2048 (v5e/v6e sweet spot)."""
    if tile_m is None:
        budget = 40 * 1024 * 1024
        fixed = 2 * D * H1 * w_dsize                     # w1 (double-buffered worst case)
        per_row = 2 * D * x_dsize + 2 * H1 * 4 + 8       # x (dbl-buf) + h/temps (f32) + out
        tile_m = (budget - fixed) // per_row if budget > fixed else _LANES
        tile_m = max(_LANES, min(2048, tile_m))
    tm = max(_LANES, (int(tile_m) // _LANES) * _LANES)
    tm = min(tm, pl.cdiv(M, _LANES) * _LANES)            # no bigger than needed
    if M <= tm:
        # Whole problem fits one tile: split into >=2 grid steps (when M allows) so both
        # of v7x's TensorCores get work; near-free on single-TC v5e/v6e.
        tm = max(_LANES, pl.cdiv(M, 2 * _LANES) * _LANES)
    return tm


def simple_regressor_forward(x, params, *, tile_m=None, compute_dtype=None):
    """x: [..., D].  Returns [M, 1] float32 where M = prod(x.shape[:-1]).  Eval mode."""
    w1, b1, w2, b2, w3, b3 = params
    D = x.shape[-1]
    x2d = x.reshape(-1, D)                   # metadata-only reshape: no HBM pass
    M = x2d.shape[0]

    cdt = jnp.dtype(compute_dtype) if compute_dtype is not None else x2d.dtype

    # ---- eval-mode fusion of the last two Linears (exact) + small param prep ----
    w1_in = w1.astype(cdt)                                                  # [D, 512]
    b1_in = b1.reshape(1, H1).astype(jnp.float32)                           # [1, 512]
    w23 = (w2 @ w3).reshape(1, H1).astype(jnp.float32)                      # [1, 512]
    b23 = (b2.reshape(1, H2) @ w3 + b3.reshape(1, H3)).astype(jnp.float32)  # [1, 1]

    # Tiny-M case only: pad rows up to one 128-row tile (a few KiB).  Large inputs are
    # NOT padded or cast in the wrapper (no extra full HBM passes over x).
    if M < _LANES:
        x2d = jnp.pad(x2d, ((0, _LANES - M), (0, 0)))
    Mx = x2d.shape[0]

    x_dsize = x2d.dtype.itemsize
    w_dsize = jnp.dtype(cdt).itemsize
    TM = _select_tile_m(Mx, D, x_dsize, w_dsize, tile_m)
    n_tiles = pl.cdiv(Mx, TM)
    nsub = TM // _LANES

    # Explicit VMEM limit sized from the actual tile footprint, with headroom.
    est = (2 * TM * D * x_dsize + 2 * D * H1 * w_dsize + 2 * TM * H1 * 4
           + 8 * H1 * 4 + 4 * TM * 4)
    vmem_limit = int(min(max(est * 5 // 4 + (2 << 20), 32 << 20), 112 << 20))
    # TODO(synk): for very large D (w1 alone > ~32 MiB) add a K grid axis with an f32
    #             accumulator scratch instead of relying on a larger VMEM limit.

    kernel = functools.partial(regressor_kernel, compute_dtype=cdt)

    out = pl.pallas_call(
        kernel,
        out_shape=jax.ShapeDtypeStruct((n_tiles * nsub, 1, _LANES), jnp.float32),
        grid=(n_tiles,),
        in_specs=[
            pl.BlockSpec((TM, D), lambda i: (i, 0)),      # x: row-tiled, full (unpadded) D
            pl.BlockSpec((D, H1), lambda i: (0, 0)),      # w1: VMEM-resident
            pl.BlockSpec((1, H1), lambda i: (0, 0)),      # b1: resident
            pl.BlockSpec((1, H1), lambda i: (0, 0)),      # w23: resident
            pl.BlockSpec((1, 1), lambda i: (0, 0)),       # b23: resident
        ],
        out_specs=pl.BlockSpec((nsub, 1, _LANES), lambda i: (i, 0, 0)),  # lane-dense
        compiler_params=pltpu.CompilerParams(
            # "parallel" lets v7x shard row tiles across its 2 TensorCores; neutral on
            # single-TC v5e/v6e.  (If profiling shows an idle core on v7x, switch this
            # axis to pltpu.CORE_PARALLEL.)
            dimension_semantics=("parallel",),
            vmem_limit_bytes=vmem_limit,
        ),
    )(x2d, w1_in, b1_in, w23, b23)

    # (n_tiles*nsub, 1, 128) -> (n_tiles*TM, 1), row-major; drop padded/garbage rows.
    return out.reshape(-1, 1)[:M]


def init_params(key, input_feature_dim):
    """weights_normal_init: normal(std=0.01) weights, zero biases (deterministic)."""
    k1, k2, k3 = jax.random.split(key, 3)
    std = 0.01
    # stored as [in, out] (transpose of the torch Linear weight)
    w1 = std * jax.random.normal(k1, (input_feature_dim, H1), dtype=jnp.float32)
    b1 = jnp.zeros((1, H1), dtype=jnp.float32)
    w2 = std * jax.random.normal(k2, (H1, H2), dtype=jnp.float32)
    b2 = jnp.zeros((1, H2), dtype=jnp.float32)
    w3 = std * jax.random.normal(k3, (H2, H3), dtype=jnp.float32)
    b3 = jnp.zeros((1, H3), dtype=jnp.float32)
    return (w1, b1, w2, b2, w3, b3)


def reference_forward(x, params):
    """Unfused f32 reference matching the PyTorch eval-mode forward."""
    w1, b1, w2, b2, w3, b3 = params
    x2d = x.reshape(-1, x.shape[-1]).astype(jnp.float32)
    h = jnp.maximum(x2d @ w1 + b1, 0.0)
    h = h @ w2 + b2
    return jax.nn.sigmoid(h @ w3 + b3)


if __name__ == "__main__":
    key = jax.random.PRNGKey(0)
    k_x, k_p, k_x2 = jax.random.split(key, 3)

    # small MIL-style input: batch=2, seq=8 instances, feature dim=64
    input_feature_dim = 64
    x = jax.random.normal(k_x, (2, 8, input_feature_dim), dtype=jnp.float32)
    params = init_params(k_p, input_feature_dim)

    # f32 path: strict check vs unfused reference (exercises the tiny-M pad branch)
    out = jax.block_until_ready(simple_regressor_forward(x, params))
    ref = reference_forward(x, params)
    assert out.shape == (16, 1), out.shape
    assert jnp.allclose(out, ref, atol=1e-5, rtol=1e-5), "f32 mismatch vs reference"

    # bf16 compute path (in-kernel cast of x, bf16 w1, f32 accumulation/epilogue)
    out_bf16 = jax.block_until_ready(
        simple_regressor_forward(x, params, compute_dtype=jnp.bfloat16))
    assert jnp.allclose(out_bf16, ref, atol=5e-3), "bf16 mismatch vs reference"

    # larger input: multi-tile grid + partial (unpadded) last row block (M=2100)
    x_big = jax.random.normal(k_x2, (3, 700, input_feature_dim), dtype=jnp.float32)
    out_big = jax.block_until_ready(simple_regressor_forward(x_big, params))
    ref_big = reference_forward(x_big, params)
    assert out_big.shape == (2100, 1), out_big.shape
    assert jnp.allclose(out_big, ref_big, atol=1e-5, rtol=1e-5), "tiled mismatch vs reference"

    print("KERNEL_OK")
</pallas_src>

<mosaic_0001>
module attributes {stable_mosaic.version = 11 : i64} {
  func.func @regressor_kernel(%arg0: i32, %arg1: memref<128x64xf32, #tpu.memory_space<vmem>>, %arg2: memref<64x512xf32, #tpu.memory_space<vmem>>, %arg3: memref<1x512xf32, #tpu.memory_space<vmem>>, %arg4: memref<1x512xf32, #tpu.memory_space<vmem>>, %arg5: memref<1x1xf32, #tpu.memory_space<vmem>>, %arg6: memref<1x1x128xf32, #tpu.memory_space<vmem>>) attributes {dimension_semantics = [#tpu.dimension_semantics<parallel>], iteration_bounds = array<i64: 1>, scalar_prefetch = 0 : i64, scratch_operands = 0 : i64, tpu.core_type = #tpu.core_type<tc>, window_params = [{transform_indices = @transform_0, window_bounds = array<i64: 128, 64>}, {pipeline_mode = #tpu.pipeline_mode<synchronous>, transform_indices = @transform_1, window_bounds = array<i64: 64, 512>}, {pipeline_mode = #tpu.pipeline_mode<synchronous>, transform_indices = @transform_2, window_bounds = array<i64: 1, 512>}, {pipeline_mode = #tpu.pipeline_mode<synchronous>, transform_indices = @transform_3, window_bounds = array<i64: 1, 512>}, {pipeline_mode = #tpu.pipeline_mode<synchronous>, transform_indices = @transform_4, window_bounds = array<i64: 1, 1>}, {transform_indices = @transform_5, window_bounds = array<i64: 1, 1, 128>}]} {
    %c0 = arith.constant 0 : index
    %c0_0 = arith.constant 0 : index
    %0 = vector.load %arg1[%c0, %c0_0] : memref<128x64xf32, #tpu.memory_space<vmem>>, vector<128x64xf32>
    %c0_1 = arith.constant 0 : index
    %c0_2 = arith.constant 0 : index
    %1 = vector.load %arg2[%c0_1, %c0_2] : memref<64x512xf32, #tpu.memory_space<vmem>>, vector<64x512xf32>
    %cst = arith.constant dense<0.000000e+00> : vector<128x512xf32>
    %2 = tpu.matmul %0, %1, %cst {dimension_numbers = #tpu.dot_dimension_numbers<[1], [0], [0], [1], [0, 0, 1, 1], [], []>} : vector<128x64xf32>, vector<64x512xf32>, vector<128x512xf32> -> vector<128x512xf32>
    %c0_3 = arith.constant 0 : index
    %c0_4 = arith.constant 0 : index
    %3 = vector.load %arg3[%c0_3, %c0_4] : memref<1x512xf32, #tpu.memory_space<vmem>>, vector<1x512xf32>
    %4 = vector.broadcast %3 : vector<1x512xf32> to vector<128x512xf32>
    %5 = arith.addf %2, %4 : vector<128x512xf32>
    %cst_5 = arith.constant 0.000000e+00 : f32
    %6 = vector.broadcast %cst_5 : f32 to vector<128x512xf32>
    %7 = arith.maximumf %5, %6 : vector<128x512xf32>
    %8 = vector.shape_cast %7 : vector<128x512xf32> to vector<1x128x512xf32>
    %c0_6 = arith.constant 0 : index
    %c0_7 = arith.constant 0 : index
    %9 = vector.load %arg4[%c0_6, %c0_7] : memref<1x512xf32, #tpu.memory_space<vmem>>, vector<1x512xf32>
    %10 = vector.shape_cast %9 : vector<1x512xf32> to vector<1x1x512xf32>
    "tpu.trace_start"() <{level = 10 : i32, message = "bqd,bkd->bqk"}> : () -> ()
    %cst_8 = arith.constant dense<0.000000e+00> : vector<1x1x128xf32>
    %11 = tpu.matmul %10, %8, %cst_8 {dimension_numbers = #tpu.dot_dimension_numbers<[2], [2], [1], [1], [0, 0, 0, 1, 1, 1], [0], [0]>} : vector<1x1x512xf32>, vector<1x128x512xf32>, vector<1x1x128xf32> -> vector<1x1x128xf32>
    "tpu.trace_stop"() : () -> ()
    %c0_9 = arith.constant 0 : index
    %c0_10 = arith.constant 0 : index
    %12 = vector.load %arg5[%c0_9, %c0_10] : memref<1x1xf32, #tpu.memory_space<vmem>>, vector<1x1xf32>
    %13 = vector.shape_cast %12 : vector<1x1xf32> to vector<1x1x1xf32>
    %14 = vector.broadcast %13 : vector<1x1x1xf32> to vector<1x1x128xf32>
    %15 = arith.addf %11, %14 : vector<1x1x128xf32>
    %16 = arith.negf %15 : vector<1x1x128xf32>
    %17 = math.exp %16 : vector<1x1x128xf32>
    %cst_11 = arith.constant 1.000000e+00 : f32
    %18 = vector.broadcast %cst_11 : f32 to vector<1x1x128xf32>
    %19 = arith.addf %18, %17 : vector<1x1x128xf32>
    %20 = arith.divf %18, %19 : vector<1x1x128xf32>
    %c0_12 = arith.constant 0 : index
    %c0_13 = arith.constant 0 : index
    %c0_14 = arith.constant 0 : index
    %21 = vector.load %arg6[%c0_12, %c0_13, %c0_14] : memref<1x1x128xf32, #tpu.memory_space<vmem>>, vector<1x1x128xf32>
    tpu.vector_store %arg6[%c0_12, %c0_13, %c0_14], %20 {strides = array<i32>} : memref<1x1x128xf32, #tpu.memory_space<vmem>>, vector<1x1x128xf32>,
    return
  }
  func.func @transform_0(%arg0: i32) -> (i32, i32) {
    %c0_i32 = arith.constant 0 : i32
    %c0_i32_0 = arith.constant 0 : i32
    return %arg0, %c0_i32 : i32, i32
  }
  func.func @transform_1(%arg0: i32) -> (i32, i32) {
    %c0_i32 = arith.constant 0 : i32
    %c0_i32_0 = arith.constant 0 : i32
    %c0_i32_1 = arith.constant 0 : i32
    return %c0_i32, %c0_i32_0 : i32, i32
  }
  func.func @transform_2(%arg0: i32) -> (i32, i32) {
    %c0_i32 = arith.constant 0 : i32
    %c0_i32_0 = arith.constant 0 : i32
    %c0_i32_1 = arith.constant 0 : i32
    return %c0_i32, %c0_i32_0 : i32, i32
  }
  func.func @transform_3(%arg0: i32) -> (i32, i32) {
    %c0_i32 = arith.constant 0 : i32
    %c0_i32_0 = arith.constant 0 : i32
    %c0_i32_1 = arith.constant 0 : i32
    return %c0_i32, %c0_i32_0 : i32, i32
  }
  func.func @transform_4(%arg0: i32) -> (i32, i32) {
    %c0_i32 = arith.constant 0 : i32
    %c0_i32_0 = arith.constant 0 : i32
    %c0_i32_1 = arith.constant 0 : i32
    return %c0_i32, %c0_i32_0 : i32, i32
  }
  func.func @transform_5(%arg0: i32) -> (i32, i32, i32) {
    %c0_i32 = arith.constant 0 : i32
    %c0_i32_0 = arith.constant 0 : i32
    %c0_i32_1 = arith.constant 0 : i32
    return %arg0, %c0_i32, %c0_i32_0 : i32, i32, i32
  }
}

</mosaic_0001>

<llo_original>
// kernel: tpu_custom_call.1
$region0: #{tpu_custom_call.1}
  #allocation0 [shape = 'u32[]', space=smem, size = 0x4, offset = 0x4, fixed_abs, tag = 'smem constant byte address 0x4 - core index']
  #allocation1 [shape = 'u32[144,128]{1,0:T(1,128)}', space=vmem, size = 0x12000, scoped, tag = 'internal scratch']
  #allocation2 [shape = 'f32[1,1]{1,0:T(1,128)S(1)}', space=vmem, size = 0x200, scoped, tag = 'scoped memory for tpu_custom_call.1']
  %s0 = inlined_call_operand.vmem [shape: f32[128,64], index: 0, kind: input, shape index: {}]
  %s1 = inlined_call_operand.hbm [shape: f32[64,512], index: 1, kind: input, shape index: {}]
  %s2 = inlined_call_operand.vmem [shape: f32[1,512], index: 2, kind: input, shape index: {}]
  %s3 = inlined_call_operand.vmem [shape: f32[1,512], index: 3, kind: input, shape index: {}]
  %s4 = inlined_call_operand.<no memory space> [shape: f32[1,1], index: 4, kind: input, shape index: {}]
  %s5 = inlined_call_operand.hbm [shape: f32[1,1,128], index: 5, kind: output, shape index: {}]
  %s6 = sld [smem:[#allocation0]]
  $region34: #{tpu_custom_call.1} parent=0
    _
  %s8 = ssub.s32 1, %s6
  %s9 = scalar_select 0, %s8, %s6
  %v10 = vstv %s4
  %11 = vst [vmem:[#allocation2] sm:$0x1] %v10
  $region1: #{tpu_custom_call.1} parent=0
    #allocation3 [shape = 'u8[131072]{0}', space=vmem, size = 0x20000, scoped, tag = 'input window, operand 1, single buffered']
    #allocation4 [shape = 's32[1]{0}', space=sflag, size = 0x4, scoped, tag = 'scoped memory for tpu_custom_call.1']
    #allocation5 [shape = 's32[1]{0}', space=sflag, size = 0x4, scoped, tag = 'scoped memory for tpu_custom_call.1']
    #allocation6 [shape = 'u8[512]{0}', space=vmem, size = 0x400, scoped, tag = 'output window, operand 0, single buffered']
    %12 = vsyncpa [#allocation4], 0
    %13 = vsyncpa [#allocation5], 0
    // Predicated region
    $region2: #{tpu_custom_call.1} parent=1 // pred_check
      _
    $region3: #{tpu_custom_call.1} parent=1 // pred_check_branch
      %15 = sbr.rel (0) target = $region5
    $region4: #{tpu_custom_call.1} parent=1 // pred_region
      _
    $region5: #{tpu_custom_call.1} parent=1 // pred_fallthru
      _
    // Predicated region
    $region6: #{tpu_custom_call.1} parent=1 // pred_check
      _
    $region7: #{tpu_custom_call.1} parent=1 // pred_check_branch
      %17 = sbr.rel (0) target = $region9
    $region8: #{tpu_custom_call.1} parent=1 // pred_region
      %s19 = ssub.s32 4096, 4096
      %20 = vsyncadd [#allocation4], %s19
      %s21 = sshll.u32 [#allocation3], 4
      %s22 = int_to_ptr.vmem [resolvable:$true] %s21
      %27 = dma.hbm_to_vmem [thread:$0]  %s1, 4096, %s22, [#allocation4], 512, 512, 32
    $region9: #{tpu_custom_call.1} parent=1 // pred_fallthru
      _
    // Predicated region
    $region10: #{tpu_custom_call.1} parent=1 // pred_check
      _
    $region11: #{tpu_custom_call.1} parent=1 // pred_check_branch
      %29 = sbr.rel (0) target = $region13
    $region12: #{tpu_custom_call.1} parent=1 // pred_region
      _
    $region13: #{tpu_custom_call.1} parent=1 // pred_fallthru
      _
    // Predicated region
    $region14: #{tpu_custom_call.1} parent=1 // pred_check
      _
    $region15: #{tpu_custom_call.1} parent=1 // pred_check_branch
      %31 = sbr.rel (0) target = $region17
    $region16: #{tpu_custom_call.1} parent=1 // pred_region
      _
    $region17: #{tpu_custom_call.1} parent=1 // pred_fallthru
      _
    // Predicated region
    $region18: #{tpu_custom_call.1} parent=1 // pred_check
      _
    $region19: #{tpu_custom_call.1} parent=1 // pred_check_branch
      %33 = sbr.rel (0) target = $region21
    $region20: #{tpu_custom_call.1} parent=1 // pred_region
      _
    $region21: #{tpu_custom_call.1} parent=1 // pred_fallthru
      _
    // Predicated region
    $region22: #{tpu_custom_call.1} parent=1 // pred_check
      _
    $region23: #{tpu_custom_call.1} parent=1 // pred_check_branch
      %35 = sbr.rel (0) target = $region25
    $region24: #{tpu_custom_call.1} parent=1 // pred_region
      %36 = dma.done [#allocation4], 4096
    $region25: #{tpu_custom_call.1} parent=1 // pred_fallthru
      _
    %v37 = vld [vmem:[%s0] sm:$0xff]
    %v38 = vld [vmem:[%s0 + $0x8] sm:$0xff]
    %v39 = vld [vmem:[%s0 + $0x10] sm:$0xff]
    %v40 = vld [vmem:[%s0 + $0x18] sm:$0xff]
    %v41 = vld [vmem:[%s0 + $0x20] sm:$0xff]
    %v42 = vld [vmem:[%s0 + $0x28] sm:$0xff]
    %v43 = vld [vmem:[%s0 + $0x30] sm:$0xff]
    %v44 = vld [vmem:[%s0 + $0x38] sm:$0xff]
    %v45 = vld [vmem:[%s0 + $0x40] sm:$0xff]
    %v46 = vld [vmem:[%s0 + $0x48] sm:$0xff]
    %v47 = vld [vmem:[%s0 + $0x50] sm:$0xff]
    %v48 = vld [vmem:[%s0 + $0x58] sm:$0xff]
    %v49 = vld [vmem:[%s0 + $0x60] sm:$0xff]
    %v50 = vld [vmem:[%s0 + $0x68] sm:$0xff]
    %v51 = vld [vmem:[%s0 + $0x70] sm:$0xff]
    %v52 = vld [vmem:[%s0 + $0x78] sm:$0xff]
    %v53 = vld [vmem:[#allocation3] sm:$0xff]
    %v54 = vld [vmem:[#allocation3 + $0x8] sm:$0xff]
    %v55 = vld [vmem:[#allocation3 + $0x10] sm:$0xff]
    %v56 = vld [vmem:[#allocation3 + $0x18] sm:$0xff]
    %v57 = vld [vmem:[#allocation3 + $0x20] sm:$0xff]
    %v58 = vld [vmem:[#allocation3 + $0x28] sm:$0xff]
    %v59 = vld [vmem:[#allocation3 + $0x30] sm:$0xff]
    %v60 = vld [vmem:[#allocation3 + $0x38] sm:$0xff]
    %v61 = vld [vmem:[#allocation3 + $0x40] sm:$0xff]
    %v62 = vld [vmem:[#allocation3 + $0x48] sm:$0xff]
    %v63 = vld [vmem:[#allocation3 + $0x50] sm:$0xff]
    %v64 = vld [vmem:[#allocation3 + $0x58] sm:$0xff]
    %v65 = vld [vmem:[#allocation3 + $0x60] sm:$0xff]
    %v66 = vld [vmem:[#allocation3 + $0x68] sm:$0xff]
    %v67 = vld [vmem:[#allocation3 + $0x70] sm:$0xff]
    %v68 = vld [vmem:[#allocation3 + $0x78] sm:$0xff]
    %v69 = vld [vmem:[#allocation3 + $0x80] sm:$0xff]
    %v70 = vld [vmem:[#allocation3 + $0x88] sm:$0xff]
    %v71 = vld [vmem:[#allocation3 + $0x90] sm:$0xff]
    %v72 = vld [vmem:[#allocation3 + $0x98] sm:$0xff]
    %v73 = vld [vmem:[#allocation3 + $0xa0] sm:$0xff]
    %v74 = vld [vmem:[#allocation3 + $0xa8] sm:$0xff]
    %v75 = vld [vmem:[#allocation3 + $0xb0] sm:$0xff]
    %v76 = vld [vmem:[#allocation3 + $0xb8] sm:$0xff]
    %v77 = vld [vmem:[#allocation3 + $0xc0] sm:$0xff]
    %v78 = vld [vmem:[#allocation3 + $0xc8] sm:$0xff]
    %v79 = vld [vmem:[#allocation3 + $0xd0] sm:$0xff]
    %v80 = vld [vmem:[#allocation3 + $0xd8] sm:$0xff]
    %v81 = vld [vmem:[#allocation3 + $0xe0] sm:$0xff]
    %v82 = vld [vmem:[#allocation3 + $0xe8] sm:$0xff]
    %v83 = vld [vmem:[#allocation3 + $0xf0] sm:$0xff]
    %v84 = vld [vmem:[#allocation3 + $0xf8] sm:$0xff]
    %v85 = vld [vmem:[%s2] sm:$0xf]
    %v87 = vlaneseq
    %v88 = vshrl.u32 %v87, 7
    %v89 = vsub.s32 0, %v88
    %v90 = vrot.slane %v85, %v89
    %v91 = vlaneseq
    %v92 = vshrl.u32 %v91, 7
    %v93 = vsub.s32 1, %v92
    %v94 = vrot.slane %v85, %v93
    %v95 = vlaneseq
    %v96 = vshrl.u32 %v95, 7
    %v97 = vsub.s32 2, %v96
    %v98 = vrot.slane %v85, %v97
    %v99 = vlaneseq
    %v100 = vshrl.u32 %v99, 7
    %v101 = vsub.s32 3, %v100
    %v102 = vrot.slane %v85, %v101
    %vm107 = vcmask 523264
    %v109 = vsel %vm107, %v37, 0
    %v112 = vsel %vm107, %v38, 0
    %v115 = vsel %vm107, %v39, 0
    %v118 = vsel %vm107, %v40, 0
    %v121 = vsel %vm107, %v41, 0
    %v124 = vsel %vm107, %v42, 0
    %v127 = vsel %vm107, %v43, 0
    %v130 = vsel %vm107, %v44, 0
    %v133 = vsel %vm107, %v45, 0
    %v136 = vsel %vm107, %v46, 0
    %v139 = vsel %vm107, %v47, 0
    %v142 = vsel %vm107, %v48, 0
    %v145 = vsel %vm107, %v49, 0
    %v148 = vsel %vm107, %v50, 0
    %v151 = vsel %vm107, %v51, 0
    %v154 = vsel %vm107, %v52, 0
    %156 = vmatprep.subr.mxu0 %v54
    %157 = vmatpush1.msra.mxu0 %v53
    %158 = vmatprep.subr.mxu0 %v58
    %159 = vmatpush1.msra.mxu0 %v57
    %160 = vmatprep.subr.mxu0 %v62
    %161 = vmatpush1.msra.mxu0 %v61
    %162 = vmatprep.subr.mxu0 %v66
    %163 = vmatpush1.msra.mxu0 %v65
    %164 = vmatprep.subr.mxu0 %v70
    %165 = vmatpush1.msra.mxu0 %v69
    %166 = vmatprep.subr.mxu0 %v74
    %167 = vmatpush1.msra.mxu0 %v73
    %168 = vmatprep.subr.mxu0 %v78
    %169 = vmatpush1.msra.mxu0 %v77
    %170 = vmatprep.subr.mxu0 %v82
    %171 = vmatpush1.msra.mxu0 %v81
    %172 = vmatprep.subr.mxu0 0.0
    %173 = vmatpush1.msra.mxu0 0.0
    %174 = vmatprep.subr.mxu0 0.0
    %175 = vmatpush1.msra.mxu0 0.0
    %176 = vmatprep.subr.mxu0 0.0
    %177 = vmatpush1.msra.mxu0 0.0
    %178 = vmatprep.subr.mxu0 0.0
    %179 = vmatpush1.msra.mxu0 0.0
    %180 = vmatprep.subr.mxu0 0.0
    %181 = vmatpush1.msra.mxu0 0.0
    %182 = vmatprep.subr.mxu0 0.0
    %183 = vmatpush1.msra.mxu0 0.0
    %184 = vmatprep.subr.mxu0 0.0
    %185 = vmatpush1.msra.mxu0 0.0
    %186 = vmatprep.subr.mxu0 0.0
    %187 = vmatpush1.msra.mxu0 0.0
    %188 = vmatprep.subr.mxu0 0.0
    %189 = vmatpush1.msra.mxu0 0.0
    %190 = vmatprep.subr.mxu0 0.0
    %191 = vmatpush1.msra.mxu0 0.0
    %192 = vmatprep.subr.mxu0 0.0
    %193 = vmatpush1.msra.mxu0 0.0
    %194 = vmatprep.subr.mxu0 0.0
    %195 = vmatpush1.msra.mxu0 0.0
    %196 = vmatprep.subr.mxu0 0.0
    %197 = vmatpush1.msra.mxu0 0.0
    %198 = vmatprep.subr.mxu0 0.0
    %199 = vmatpush1.msra.mxu0 0.0
    %200 = vmatprep.subr.mxu0 0.0
    %201 = vmatpush1.msra.mxu0 0.0
    %202 = vmatprep.subr.mxu0 0.0
    %203 = vmatpush1.msra.mxu0 0.0
    %204 = vmatprep.subr.mxu0 0.0
    %205 = vmatpush1.msra.mxu0 0.0
    %206 = vmatprep.subr.mxu0 0.0
    %207 = vmatpush1.msra.mxu0 0.0
    %208 = vmatprep.subr.mxu0 0.0
    %209 = vmatpush1.msra.mxu0 0.0
    %210 = vmatprep.subr.mxu0 0.0
    %211 = vmatpush1.msra.mxu0 0.0
    %212 = vmatprep.subr.mxu0 0.0
    %213 = vmatpush1.msra.mxu0 0.0
    %214 = vmatprep.subr.mxu0 0.0
    %215 = vmatpush1.msra.mxu0 0.0
    %216 = vmatprep.subr.mxu0 0.0
    %217 = vmatpush1.msra.mxu0 0.0
    %218 = vmatprep.subr.mxu0 0.0
    %219 = vmatpush1.msra.mxu0 0.0
    %220 = vmatprep.mubr.f32.mxu0 0.0
    %221 = vmatmul.mubr.f32.gmra.mrb[0].mxu0 %v109
    %v222 = vpop.f32.mrb[0].mxu0
    %v223 = vadd.f32 %v90, %v222
    %v224 = vpop.f32.mrb[0].mxu0
    %v225 = vadd.f32 %v94, %v224
    %226 = vmatprep.mubr.f32.mxu0 0.0
    %227 = vmatmul.mubr.f32.gmra.mrb[0].mxu0 %v112
    %v228 = vpop.f32.mrb[0].mxu0
    %v229 = vadd.f32 %v90, %v228
    %v230 = vpop.f32.mrb[0].mxu0
    %v231 = vadd.f32 %v94, %v230
    %232 = vmatprep.mubr.f32.mxu0 0.0
    %233 = vmatmul.mubr.f32.gmra.mrb[0].mxu0 %v115
    %v234 = vpop.f32.mrb[0].mxu0
    %v235 = vadd.f32 %v90, %v234
    %v236 = vpop.f32.mrb[0].mxu0
    %v237 = vadd.f32 %v94, %v236
    %238 = vmatprep.mubr.f32.mxu0 0.0
    %239 = vmatmul.mubr.f32.gmra.mrb[0].mxu0 %v118
    %v240 = vpop.f32.mrb[0].mxu0
    %v241 = vadd.f32 %v90, %v240
    %v242 = vpop.f32.mrb[0].mxu0
    %v243 = vadd.f32 %v94, %v242
    %244 = vmatprep.mubr.f32.mxu0 0.0
    %245 = vmatmul.mubr.f32.gmra.mrb[0].mxu0 %v121
    %v246 = vpop.f32.mrb[0].mxu0
    %v247 = vadd.f32 %v90, %v246
    %v248 = vpop.f32.mrb[0].mxu0
    %v249 = vadd.f32 %v94, %v248
    %250 = vmatprep.mubr.f32.mxu0 0.0
    %251 = vmatmul.mubr.f32.gmra.mrb[0].mxu0 %v124
    %v252 = vpop.f32.mrb[0].mxu0
    %v253 = vadd.f32 %v90, %v252
    %v254 = vpop.f32.mrb[0].mxu0
    %v255 = vadd.f32 %v94, %v254
    %256 = vmatprep.mubr.f32.mxu0 0.0
    %257 = vmatmul.mubr.f32.gmra.mrb[0].mxu0 %v127
    %v258 = vpop.f32.mrb[0].mxu0
    %v259 = vadd.f32 %v90, %v258
    %v260 = vpop.f32.mrb[0].mxu0
    %v261 = vadd.f32 %v94, %v260
    %262 = vmatprep.mubr.f32.mxu0 0.0
    %263 = vmatmul.mubr.f32.gmra.mrb[0].mxu0 %v130
    %v264 = vpop.f32.mrb[0].mxu0
    %v265 = vadd.f32 %v90, %v264
    %v266 = vpop.f32.mrb[0].mxu0
    %v267 = vadd.f32 %v94, %v266
    %268 = vmatprep.mubr.f32.mxu0 0.0
    %269 = vmatmul.mubr.f32.gmra.mrb[0].mxu0 %v133
    %v270 = vpop.f32.mrb[0].mxu0
    %v271 = vadd.f32 %v90, %v270
    %v272 = vpop.f32.mrb[0].mxu0
    %v273 = vadd.f32 %v94, %v272
    %274 = vmatprep.mubr.f32.mxu0 0.0
    %275 = vmatmul.mubr.f32.gmra.mrb[0].mxu0 %v136
    %v276 = vpop.f32.mrb[0].mxu0
    %v277 = vadd.f32 %v90, %v276
    %v278 = vpop.f32.mrb[0].mxu0
    %v279 = vadd.f32 %v94, %v278
    %280 = vmatprep.mubr.f32.mxu0 0.0
    %281 = vmatmul.mubr.f32.gmra.mrb[0].mxu0 %v139
    %v282 = vpop.f32.mrb[0].mxu0
    %v283 = vadd.f32 %v90, %v282
    %v284 = vpop.f32.mrb[0].mxu0
    %v285 = vadd.f32 %v94, %v284
    %286 = vmatprep.mubr.f32.mxu0 0.0
    %287 = vmatmul.mubr.f32.gmra.mrb[0].mxu0 %v142
    %v288 = vpop.f32.mrb[0].mxu0
    %v289 = vadd.f32 %v90, %v288
    %v290 = vpop.f32.mrb[0].mxu0
    %v291 = vadd.f32 %v94, %v290
    %292 = vmatprep.mubr.f32.mxu0 0.0
    %293 = vmatmul.mubr.f32.gmra.mrb[0].mxu0 %v145
    %v294 = vpop.f32.mrb[0].mxu0
    %v295 = vadd.f32 %v90, %v294
    %v296 = vpop.f32.mrb[0].mxu0
    %v297 = vadd.f32 %v94, %v296
    %298 = vmatprep.mubr.f32.mxu0 0.0
    %299 = vmatmul.mubr.f32.gmra.mrb[0].mxu0 %v148
    %v300 = vpop.f32.mrb[0].mxu0
    %v301 = vadd.f32 %v90, %v300
    %v302 = vpop.f32.mrb[0].mxu0
    %v303 = vadd.f32 %v94, %v302
    %304 = vmatprep.mubr.f32.mxu0 0.0
    %305 = vmatmul.mubr.f32.gmra.mrb[0].mxu0 %v151
    %v306 = vpop.f32.mrb[0].mxu0
    %v307 = vadd.f32 %v90, %v306
    %v308 = vpop.f32.mrb[0].mxu0
    %v309 = vadd.f32 %v94, %v308
    %310 = vmatprep.mubr.f32.mxu0 0.0
    %311 = vmatmul.mubr.f32.gmra.mrb[0].mxu0 %v154
    %v312 = vpop.f32.mrb[0].mxu0
    %v313 = vadd.f32 %v90, %v312
    %v314 = vpop.f32.mrb[0].mxu0
    %v315 = vadd.f32 %v94, %v314
    %316 = vdwg.mxu0
    %317 = vmatprep.subr.mxu0 %v56
    %318 = vmatpush1.msra.mxu0 %v55
    %319 = vmatprep.subr.mxu0 %v60
    %320 = vmatpush1.msra.mxu0 %v59
    %321 = vmatprep.subr.mxu0 %v64
    %322 = vmatpush1.msra.mxu0 %v63
    %323 = vmatprep.subr.mxu0 %v68
    %324 = vmatpush1.msra.mxu0 %v67
    %325 = vmatprep.subr.mxu0 %v72
    %326 = vmatpush1.msra.mxu0 %v71
    %327 = vmatprep.subr.mxu0 %v76
    %328 = vmatpush1.msra.mxu0 %v75
    %329 = vmatprep.subr.mxu0 %v80
    %330 = vmatpush1.msra.mxu0 %v79
    %331 = vmatprep.subr.mxu0 %v84
    %332 = vmatpush1.msra.mxu0 %v83
    %333 = vmatprep.subr.mxu0 0.0
    %334 = vmatpush1.msra.mxu0 0.0
    %335 = vmatprep.subr.mxu0 0.0
    %336 = vmatpush1.msra.mxu0 0.0
    %337 = vmatprep.subr.mxu0 0.0
    %338 = vmatpush1.msra.mxu0 0.0
    %339 = vmatprep.subr.mxu0 0.0
    %340 = vmatpush1.msra.mxu0 0.0
    %341 = vmatprep.subr.mxu0 0.0
    %342 = vmatpush1.msra.mxu0 0.0
    %343 = vmatprep.subr.mxu0 0.0
    %344 = vmatpush1.msra.mxu0 0.0
    %345 = vmatprep.subr.mxu0 0.0
    %346 = vmatpush1.msra.mxu0 0.0
    %347 = vmatprep.subr.mxu0 0.0
    %348 = vmatpush1.msra.mxu0 0.0
    %349 = vmatprep.subr.mxu0 0.0
    %350 = vmatpush1.msra.mxu0 0.0
    %351 = vmatprep.subr.mxu0 0.0
    %352 = vmatpush1.msra.mxu0 0.0
    %353 = vmatprep.subr.mxu0 0.0
    %354 = vmatpush1.msra.mxu0 0.0
    %355 = vmatprep.subr.mxu0 0.0
    %356 = vmatpush1.msra.mxu0 0.0
    %357 = vmatprep.subr.mxu0 0.0
    %358 = vmatpush1.msra.mxu0 0.0
    %359 = vmatprep.subr.mxu0 0.0
    %360 = vmatpush1.msra.mxu0 0.0
    %361 = vmatprep.subr.mxu0 0.0
    %362 = vmatpush1.msra.mxu0 0.0
    %363 = vmatprep.subr.mxu0 0.0
    %364 = vmatpush1.msra.mxu0 0.0
    %365 = vmatprep.subr.mxu0 0.0
    %366 = vmatpush1.msra.mxu0 0.0
    %367 = vmatprep.subr.mxu0 0.0
    %368 = vmatpush1.msra.mxu0 0.0
    %369 = vmatprep.subr.mxu0 0.0
    %370 = vmatpush1.msra.mxu0 0.0
    %371 = vmatprep.subr.mxu0 0.0
    %372 = vmatpush1.msra.mxu0 0.0
    %373 = vmatprep.subr.mxu0 0.0
    %374 = vmatpush1.msra.mxu0 0.0
    %375 = vmatprep.subr.mxu0 0.0
    %376 = vmatpush1.msra.mxu0 0.0
    %377 = vmatprep.subr.mxu0 0.0
    %378 = vmatpush1.msra.mxu0 0.0
    %379 = vmatprep.subr.mxu0 0.0
    %380 = vmatpush1.msra.mxu0 0.0
    %381 = vmatprep.mubr.f32.mxu0 0.0
    %382 = vmatmul.mubr.f32.gmra.mrb[0].mxu0 %v109
    %v383 = vpop.f32.mrb[0].mxu0
    %v384 = vadd.f32 %v98, %v383
    %v385 = vpop.f32.mrb[0].mxu0
    %v386 = vadd.f32 %v102, %v385
    %387 = vmatprep.mubr.f32.mxu0 0.0
    %388 = vmatmul.mubr.f32.gmra.mrb[0].mxu0 %v112
    %v389 = vpop.f32.mrb[0].mxu0
    %v390 = vadd.f32 %v98, %v389
    %v391 = vpop.f32.mrb[0].mxu0
    %v392 = vadd.f32 %v102, %v391
    %393 = vmatprep.mubr.f32.mxu0 0.0
    %394 = vmatmul.mubr.f32.gmra.mrb[0].mxu0 %v115
    %v395 = vpop.f32.mrb[0].mxu0
    %v396 = vadd.f32 %v98, %v395
    %v397 = vpop.f32.mrb[0].mxu0
    %v398 = vadd.f32 %v102, %v397
    %399 = vmatprep.mubr.f32.mxu0 0.0
    %400 = vmatmul.mubr.f32.gmra.mrb[0].mxu0 %v118
    %v401 = vpop.f32.mrb[0].mxu0
    %v402 = vadd.f32 %v98, %v401
    %v403 = vpop.f32.mrb[0].mxu0
    %v404 = vadd.f32 %v102, %v403
    %405 = vmatprep.mubr.f32.mxu0 0.0
    %406 = vmatmul.mubr.f32.gmra.mrb[0].mxu0 %v121
    %v407 = vpop.f32.mrb[0].mxu0
    %v408 = vadd.f32 %v98, %v407
    %v409 = vpop.f32.mrb[0].mxu0
    %v410 = vadd.f32 %v102, %v409
    %411 = vmatprep.mubr.f32.mxu0 0.0
    %412 = vmatmul.mubr.f32.gmra.mrb[0].mxu0 %v124
    %v413 = vpop.f32.mrb[0].mxu0
    %v414 = vadd.f32 %v98, %v413
    %v415 = vpop.f32.mrb[0].mxu0
    %v416 = vadd.f32 %v102, %v415
    %417 = vmatprep.mubr.f32.mxu0 0.0
    %418 = vmatmul.mubr.f32.gmra.mrb[0].mxu0 %v127
    %v419 = vpop.f32.mrb[0].mxu0
    %v420 = vadd.f32 %v98, %v419
    %v421 = vpop.f32.mrb[0].mxu0
    %v422 = vadd.f32 %v102, %v421
    %423 = vmatprep.mubr.f32.mxu0 0.0
    %424 = vmatmul.mubr.f32.gmra.mrb[0].mxu0 %v130
    %v425 = vpop.f32.mrb[0].mxu0
    %v426 = vadd.f32 %v98, %v425
    %v427 = vpop.f32.mrb[0].mxu0
    %v428 = vadd.f32 %v102, %v427
    %429 = vmatprep.mubr.f32.mxu0 0.0
    %430 = vmatmul.mubr.f32.gmra.mrb[0].mxu0 %v133
    %v431 = vpop.f32.mrb[0].mxu0
    %v432 = vadd.f32 %v98, %v431
    %v433 = vpop.f32.mrb[0].mxu0
    %v434 = vadd.f32 %v102, %v433
    %435 = vmatprep.mubr.f32.mxu0 0.0
    %436 = vmatmul.mubr.f32.gmra.mrb[0].mxu0 %v136
    %v437 = vpop.f32.mrb[0].mxu0
    %v438 = vadd.f32 %v98, %v437
    %v439 = vpop.f32.mrb[0].mxu0
    %v440 = vadd.f32 %v102, %v439
    %441 = vmatprep.mubr.f32.mxu0 0.0
    %442 = vmatmul.mubr.f32.gmra.mrb[0].mxu0 %v139
    %v443 = vpop.f32.mrb[0].mxu0
    %v444 = vadd.f32 %v98, %v443
    %v445 = vpop.f32.mrb[0].mxu0
    %v446 = vadd.f32 %v102, %v445
    %447 = vmatprep.mubr.f32.mxu0 0.0
    %448 = vmatmul.mubr.f32.gmra.mrb[0].mxu0 %v142
    %v449 = vpop.f32.mrb[0].mxu0
    %v450 = vadd.f32 %v98, %v449
    %v451 = vpop.f32.mrb[0].mxu0
    %v452 = vadd.f32 %v102, %v451
    %453 = vmatprep.mubr.f32.mxu0 0.0
    %454 = vmatmul.mubr.f32.gmra.mrb[0].mxu0 %v145
    %v455 = vpop.f32.mrb[0].mxu0
    %v456 = vadd.f32 %v98, %v455
    %v457 = vpop.f32.mrb[0].mxu0
    %v458 = vadd.f32 %v102, %v457
    %459 = vmatprep.mubr.f32.mxu0 0.0
    %460 = vmatmul.mubr.f32.gmra.mrb[0].mxu0 %v148
    %v461 = vpop.f32.mrb[0].mxu0
    %v462 = vadd.f32 %v98, %v461
    %v463 = vpop.f32.mrb[0].mxu0
    %v464 = vadd.f32 %v102, %v463
    %465 = vmatprep.mubr.f32.mxu0 0.0
    %466 = vmatmul.mubr.f32.gmra.mrb[0].mxu0 %v151
    %v467 = vpop.f32.mrb[0].mxu0
    %v468 = vadd.f32 %v98, %v467
    %v469 = vpop.f32.mrb[0].mxu0
    %v470 = vadd.f32 %v102, %v469
    %471 = vmatprep.mubr.f32.mxu0 0.0
    %472 = vmatmul.mubr.f32.gmra.mrb[0].mxu0 %v154
    %v473 = vpop.f32.mrb[0].mxu0
    %v474 = vadd.f32 %v98, %v473
    %v475 = vpop.f32.mrb[0].mxu0
    %v476 = vadd.f32 %v102, %v475
    %477 = vdwg.mxu0
    %v478 = vmax.f32 %v223, 0.0
    %v479 = vmax.f32 %v225, 0.0
    %v480 = vmax.f32 %v384, 0.0
    %v481 = vmax.f32 %v386, 0.0
    %v482 = vmax.f32 %v229, 0.0
    %v483 = vmax.f32 %v231, 0.0
    %v484 = vmax.f32 %v390, 0.0
    %v485 = vmax.f32 %v392, 0.0
    %v486 = vmax.f32 %v235, 0.0
    %v487 = vmax.f32 %v237, 0.0
    %v488 = vmax.f32 %v396, 0.0
    %v489 = vmax.f32 %v398, 0.0
    %v490 = vmax.f32 %v241, 0.0
    %v491 = vmax.f32 %v243, 0.0
    %v492 = vmax.f32 %v402, 0.0
    %v493 = vmax.f32 %v404, 0.0
    %v494 = vmax.f32 %v247, 0.0
    %v495 = vmax.f32 %v249, 0.0
    %v496 = vmax.f32 %v408, 0.0
    %v497 = vmax.f32 %v410, 0.0
    %v498 = vmax.f32 %v253, 0.0
    %v499 = vmax.f32 %v255, 0.0
    %v500 = vmax.f32 %v414, 0.0
    %v501 = vmax.f32 %v416, 0.0
    %v502 = vmax.f32 %v259, 0.0
    %v503 = vmax.f32 %v261, 0.0
    %v504 = vmax.f32 %v420, 0.0
    %v505 = vmax.f32 %v422, 0.0
    %v506 = vmax.f32 %v265, 0.0
    %v507 = vmax.f32 %v267, 0.0
    %v508 = vmax.f32 %v426, 0.0
    %v509 = vmax.f32 %v428, 0.0
    %v510 = vmax.f32 %v271, 0.0
    %v511 = vmax.f32 %v273, 0.0
    %v512 = vmax.f32 %v432, 0.0
    %v513 = vmax.f32 %v434, 0.0
    %v514 = vmax.f32 %v277, 0.0
    %v515 = vmax.f32 %v279, 0.0
    %v516 = vmax.f32 %v438, 0.0
    %v517 = vmax.f32 %v440, 0.0
    %v518 = vmax.f32 %v283, 0.0
    %v519 = vmax.f32 %v285, 0.0
    %v520 = vmax.f32 %v444, 0.0
    %v521 = vmax.f32 %v446, 0.0
    %v522 = vmax.f32 %v289, 0.0
    %v523 = vmax.f32 %v291, 0.0
    %v524 = vmax.f32 %v450, 0.0
    %v525 = vmax.f32 %v452, 0.0
    %v526 = vmax.f32 %v295, 0.0
    %v527 = vmax.f32 %v297, 0.0
    %v528 = vmax.f32 %v456, 0.0
    %v529 = vmax.f32 %v458, 0.0
    %v530 = vmax.f32 %v301, 0.0
    %v531 = vmax.f32 %v303, 0.0
    %v532 = vmax.f32 %v462, 0.0
    %v533 = vmax.f32 %v464, 0.0
    %v534 = vmax.f32 %v307, 0.0
    %v535 = vmax.f32 %v309, 0.0
    %v536 = vmax.f32 %v468, 0.0
    %v537 = vmax.f32 %v470, 0.0
    %v538 = vmax.f32 %v313, 0.0
    %v539 = vmax.f32 %v315, 0.0
    %v540 = vmax.f32 %v474, 0.0
    %v541 = vmax.f32 %v476, 0.0
    %v542 = vld [vmem:[%s3] sm:$0xf]
    %v543 = vld [vmem:[#allocation2] sm:$0x1]
    %545 = vset.pattern.permute.xlu0 0
    %546 = vperm.xlu0 %545, %v543
    %v547 = vpop.permute.xlu0 %546
    %v549 = vlaneseq
    %v550 = vshrl.u32 %v549, 7
    %v551 = vsub.s32 0, %v550
    %v552 = vrot.slane %v547, %v551
    %v554 = vlaneseq
    %v555 = vshrl.u32 %v554, 7
    %v556 = vsub.s32 0, %v555
    %v557 = vrot.slane %v542, %v556
    %v558 = vlaneseq
    %v559 = vshrl.u32 %v558, 7
    %v560 = vsub.s32 1, %v559
    %v561 = vrot.slane %v542, %v560
    %v562 = vlaneseq
    %v563 = vshrl.u32 %v562, 7
    %v564 = vsub.s32 2, %v563
    %v565 = vrot.slane %v542, %v564
    %v566 = vlaneseq
    %v567 = vshrl.u32 %v566, 7
    %v568 = vsub.s32 3, %v567
    %v569 = vrot.slane %v542, %v568
    %574 = vmatprep.subr.mxu0 %v479
    %575 = vmatpush1.xpose.msra.mxu0 %v478
    %576 = vmatprep.subr.mxu0 %v483
    %577 = vmatpush1.xpose.msra.mxu0 %v482
    %578 = vmatprep.subr.mxu0 %v487
    %579 = vmatpush1.xpose.msra.mxu0 %v486
    %580 = vmatprep.subr.mxu0 %v491
    %581 = vmatpush1.xpose.msra.mxu0 %v490
    %582 = vmatprep.subr.mxu0 %v495
    %583 = vmatpush1.xpose.msra.mxu0 %v494
    %584 = vmatprep.subr.mxu0 %v499
    %585 = vmatpush1.xpose.msra.mxu0 %v498
    %586 = vmatprep.subr.mxu0 %v503
    %587 = vmatpush1.xpose.msra.mxu0 %v502
    %588 = vmatprep.subr.mxu0 %v507
    %589 = vmatpush1.xpose.msra.mxu0 %v506
    %590 = vmatprep.subr.mxu0 %v511
    %591 = vmatpush1.xpose.msra.mxu0 %v510
    %592 = vmatprep.subr.mxu0 %v515
    %593 = vmatpush1.xpose.msra.mxu0 %v514
    %594 = vmatprep.subr.mxu0 %v519
    %595 = vmatpush1.xpose.msra.mxu0 %v518
    %596 = vmatprep.subr.mxu0 %v523
    %597 = vmatpush1.xpose.msra.mxu0 %v522
    %598 = vmatprep.subr.mxu0 %v527
    %599 = vmatpush1.xpose.msra.mxu0 %v526
    %600 = vmatprep.subr.mxu0 %v531
    %601 = vmatpush1.xpose.msra.mxu0 %v530
    %602 = vmatprep.subr.mxu0 %v535
    %603 = vmatpush1.xpose.msra.mxu0 %v534
    %604 = vmatprep.subr.mxu0 %v539
    %605 = vmatpush1.xpose.msra.mxu0 %v538
    %606 = vmatprep.subr.mxu0 0.0
    %607 = vmatpush1.xpose.msra.mxu0 0.0
    %608 = vmatprep.subr.mxu0 0.0
    %609 = vmatpush1.xpose.msra.mxu0 0.0
    %610 = vmatprep.subr.mxu0 0.0
    %611 = vmatpush1.xpose.msra.mxu0 0.0
    %612 = vmatprep.subr.mxu0 0.0
    %613 = vmatpush1.xpose.msra.mxu0 0.0
    %614 = vmatprep.subr.mxu0 0.0
    %615 = vmatpush1.xpose.msra.mxu0 0.0
    %616 = vmatprep.subr.mxu0 0.0
    %617 = vmatpush1.xpose.msra.mxu0 0.0
    %618 = vmatprep.subr.mxu0 0.0
    %619 = vmatpush1.xpose.msra.mxu0 0.0
    %620 = vmatprep.subr.mxu0 0.0
    %621 = vmatpush1.xpose.msra.mxu0 0.0
    %622 = vmatprep.subr.mxu0 0.0
    %623 = vmatpush1.xpose.msra.mxu0 0.0
    %624 = vmatprep.subr.mxu0 0.0
    %625 = vmatpush1.xpose.msra.mxu0 0.0
    %626 = vmatprep.subr.mxu0 0.0
    %627 = vmatpush1.xpose.msra.mxu0 0.0
    %628 = vmatprep.subr.mxu0 0.0
    %629 = vmatpush1.xpose.msra.mxu0 0.0
    %630 = vmatprep.subr.mxu0 0.0
    %631 = vmatpush1.xpose.msra.mxu0 0.0
    %632 = vmatprep.subr.mxu0 0.0
    %633 = vmatpush1.xpose.msra.mxu0 0.0
    %634 = vmatprep.subr.mxu0 0.0
    %635 = vmatpush1.xpose.msra.mxu0 0.0
    %636 = vmatprep.subr.mxu0 0.0
    %637 = vmatpush1.xpose.msra.mxu0 0.0
    %638 = vmatprep.mubr.f32.mxu0 %v561
    %639 = vmatmul.mubr.f32.gmra.mrb[0].mxu0 %v557
    %v640 = vpop.f32.mrb[0].mxu0
    %v641 = vadd.f32 %v552, %v640
    %v642 = vpop.f32.mrb[0].mxu0
    %643 = vdwg.mxu0
    %644 = vmatprep.subr.mxu0 %v481
    %645 = vmatpush1.xpose.msra.mxu0 %v480
    %646 = vmatprep.subr.mxu0 %v485
    %647 = vmatpush1.xpose.msra.mxu0 %v484
    %648 = vmatprep.subr.mxu0 %v489
    %649 = vmatpush1.xpose.msra.mxu0 %v488
    %650 = vmatprep.subr.mxu0 %v493
    %651 = vmatpush1.xpose.msra.mxu0 %v492
    %652 = vmatprep.subr.mxu0 %v497
    %653 = vmatpush1.xpose.msra.mxu0 %v496
    %654 = vmatprep.subr.mxu0 %v501
    %655 = vmatpush1.xpose.msra.mxu0 %v500
    %656 = vmatprep.subr.mxu0 %v505
    %657 = vmatpush1.xpose.msra.mxu0 %v504
    %658 = vmatprep.subr.mxu0 %v509
    %659 = vmatpush1.xpose.msra.mxu0 %v508
    %660 = vmatprep.subr.mxu0 %v513
    %661 = vmatpush1.xpose.msra.mxu0 %v512
    %662 = vmatprep.subr.mxu0 %v517
    %663 = vmatpush1.xpose.msra.mxu0 %v516
    %664 = vmatprep.subr.mxu0 %v521
    %665 = vmatpush1.xpose.msra.mxu0 %v520
    %666 = vmatprep.subr.mxu0 %v525
    %667 = vmatpush1.xpose.msra.mxu0 %v524
    %668 = vmatprep.subr.mxu0 %v529
    %669 = vmatpush1.xpose.msra.mxu0 %v528
    %670 = vmatprep.subr.mxu0 %v533
    %671 = vmatpush1.xpose.msra.mxu0 %v532
    %672 = vmatprep.subr.mxu0 %v537
    %673 = vmatpush1.xpose.msra.mxu0 %v536
    %674 = vmatprep.subr.mxu0 %v541
    %675 = vmatpush1.xpose.msra.mxu0 %v540
    %676 = vmatprep.subr.mxu0 0.0
    %677 = vmatpush1.xpose.msra.mxu0 0.0
    %678 = vmatprep.subr.mxu0 0.0
    %679 = vmatpush1.xpose.msra.mxu0 0.0
    %680 = vmatprep.subr.mxu0 0.0
    %681 = vmatpush1.xpose.msra.mxu0 0.0
    %682 = vmatprep.subr.mxu0 0.0
    %683 = vmatpush1.xpose.msra.mxu0 0.0
    %684 = vmatprep.subr.mxu0 0.0
    %685 = vmatpush1.xpose.msra.mxu0 0.0
    %686 = vmatprep.subr.mxu0 0.0
    %687 = vmatpush1.xpose.msra.mxu0 0.0
    %688 = vmatprep.subr.mxu0 0.0
    %689 = vmatpush1.xpose.msra.mxu0 0.0
    %690 = vmatprep.subr.mxu0 0.0
    %691 = vmatpush1.xpose.msra.mxu0 0.0
    %692 = vmatprep.subr.mxu0 0.0
    %693 = vmatpush1.xpose.msra.mxu0 0.0
    %694 = vmatprep.subr.mxu0 0.0
    %695 = vmatpush1.xpose.msra.mxu0 0.0
    %696 = vmatprep.subr.mxu0 0.0
    %697 = vmatpush1.xpose.msra.mxu0 0.0
    %698 = vmatprep.subr.mxu0 0.0
    %699 = vmatpush1.xpose.msra.mxu0 0.0
    %700 = vmatprep.subr.mxu0 0.0
    %701 = vmatpush1.xpose.msra.mxu0 0.0
    %702 = vmatprep.subr.mxu0 0.0
    %703 = vmatpush1.xpose.msra.mxu0 0.0
    %704 = vmatprep.subr.mxu0 0.0
    %705 = vmatpush1.xpose.msra.mxu0 0.0
    %706 = vmatprep.subr.mxu0 0.0
    %707 = vmatpush1.xpose.msra.mxu0 0.0
    %708 = vmatprep.mubr.f32.mxu0 %v569
    %709 = vmatmul.mubr.f32.gmra.mrb[0].mxu0 %v565
    %v710 = vpop.f32.mrb[0].mxu0
    %v711 = vadd.f32 %v641, %v710
    %v712 = vpop.f32.mrb[0].mxu0
    %713 = vdwg.mxu0
    %v714 = vxor.u32 %v711, 2147483648
    %v715 = vmul.f32 %v714, 1.442695
    %v716 = vpow.pop %v715
    %v717 = vadd.f32 %v716, 1.0
    %v718 = vrcp.pop %v717
    %v719 = vmul.f32 1.0, %v718
    %720 = vst [vmem:[#allocation6] sm:$0x1] %v719
    // Predicated region
    $region26: #{tpu_custom_call.1} parent=1 // pred_check
      _
    $region27: #{tpu_custom_call.1} parent=1 // pred_check_branch
      %722 = sbr.rel (0) target = $region29
    $region28: #{tpu_custom_call.1} parent=1 // pred_region
      %s724 = ssub.s32 16, 16
      %725 = vsyncadd [#allocation5], %s724
      %s727 = sshll.u32 [#allocation6], 4
      %s728 = int_to_ptr.vmem [resolvable:$true] %s727
      %730 = dma.vmem_to_hbm [thread:$0]  %s728, 16, %s5, [#allocation5]
    $region29: #{tpu_custom_call.1} parent=1 // pred_fallthru
      _
    // Predicated region
    $region30: #{tpu_custom_call.1} parent=1 // pred_check
      _
    $region31: #{tpu_custom_call.1} parent=1 // pred_check_branch
      %732 = sbr.rel (0) target = $region33
    $region32: #{tpu_custom_call.1} parent=1 // pred_region
      %733 = dma.done [#allocation5], 16
    $region33: #{tpu_custom_call.1} parent=1 // pred_fallthru
      _
    %734 = vsyncpa [#allocation4], 1
    %735 = vsyncpa [#allocation5], 1

</llo_original>
